<compile_context>
chip_gen: v6e
topology: v6e:2x2x1
jax: 0.10.0
libtpu: 0.0.40
codegen_flags: <defaults>
</compile_context>

<pallas_src>
import jax
import jax.numpy as jnp
from jax.experimental import pallas as pl
from jax.experimental.pallas import tpu as pltpu


def _round_up(x, m):
    return ((x + m - 1) // m) * m


def mlp_kernel(x_ref, w1_ref, b1_ref, w2_ref, b2_ref, w3_ref, b3_ref, o_ref):
    # Layer 1: Linear + ReLU   (Dropout = identity at inference)
    h1 = jnp.dot(x_ref[...], w1_ref[...], preferred_element_type=jnp.float32)
    h1 = jnp.maximum(h1 + b1_ref[...], 0.0)
    # Layer 2: Linear + ReLU   (Dropout = identity at inference)
    h2 = jnp.dot(h1.astype(w2_ref.dtype), w2_ref[...], preferred_element_type=jnp.float32)
    h2 = jnp.maximum(h2 + b2_ref[...], 0.0)
    # Layer 3: Linear (narrow out_dim output; f32 store)
    o_ref[...] = (
        jnp.dot(h2.astype(w3_ref.dtype), w3_ref[...], preferred_element_type=jnp.float32)
        + b3_ref[...]
    ).astype(o_ref.dtype)


def prepare_params(w1, b1, w2, b2, w3, b3, *, use_bf16=True):
    """Cast weights to the matmul operand dtype once (hoisted out of the forward)."""
    mat_dtype = jnp.bfloat16 if use_bf16 else jnp.float32
    f32 = jnp.float32
    return (
        w1.astype(mat_dtype),
        b1.astype(f32).reshape(1, -1),
        w2.astype(mat_dtype),
        b2.astype(f32).reshape(1, -1),
        w3.astype(mat_dtype),
        b3.astype(f32).reshape(1, -1),
    )


def _choose_bm(batch, tile_m):
    """Batch tile: multiple of 8; big enough to amortize per-step overhead; for large
    batches ensure the grid has >= 2 steps (v7x has 2 TensorCores)."""
    batch8 = _round_up(batch, 8)
    if batch8 <= tile_m:
        if batch8 >= 512:
            # Split into (at least) two grid steps so both v7x TCs get work.
            return _round_up((batch8 + 1) // 2, 8)
        return batch8
    return tile_m


def mlp_forward(x, params, *, tile_m=1024):
    """x: (batch, input_dim) float array; params: output of prepare_params."""
    w1, b1, w2, b2, w3, b3 = params
    batch, input_dim = x.shape
    hidden = w1.shape[1]
    out_dim = w3.shape[1]

    mat_dtype = w1.dtype
    mat_bytes = jnp.dtype(mat_dtype).itemsize

    bm = _choose_bm(batch, tile_m)
    batch_p = _round_up(batch, bm)
    grid = (batch_p // bm,)

    # Only the ragged batch tail is padded (no K padding, no pad at all when divisible).
    x_in = x.astype(mat_dtype)
    if batch_p != batch:
        x_in = jnp.pad(x_in, ((0, batch_p - batch), (0, 0)))

    # VMEM budget (conservative: lane-pad narrow dims to 128 for the estimate).
    out_cols_vmem = _round_up(out_dim, 128)
    weight_bytes = (input_dim * hidden + hidden * hidden + hidden * out_cols_vmem) * mat_bytes
    vmem_bytes = (
        2 * bm * input_dim * mat_bytes          # double-buffered x tiles
        + 2 * bm * out_cols_vmem * 4            # double-buffered out tiles
        + weight_bytes                          # resident weights
        + (2 * hidden + out_cols_vmem) * 4      # resident biases
        + 2 * bm * hidden * 4                   # h1 / h2 activations
    )
    vmem_limit = int(min(max(2 * vmem_bytes, 32 * 1024 * 1024), 64 * 1024 * 1024))

    flops = 2 * batch_p * (input_dim * hidden + hidden * hidden + hidden * out_dim)
    bytes_accessed = (
        batch_p * input_dim * mat_bytes
        + (input_dim * hidden + hidden * hidden + hidden * out_dim) * mat_bytes
        + (2 * hidden + out_dim) * 4
        + batch_p * out_dim * 4
    )

    out_full = pl.pallas_call(
        mlp_kernel,
        out_shape=jax.ShapeDtypeStruct((batch_p, out_dim), jnp.float32),
        grid=grid,
        in_specs=[
            pl.BlockSpec((bm, input_dim), lambda i: (i, 0)),      # x: streamed per batch tile
            pl.BlockSpec((input_dim, hidden), lambda i: (0, 0)),  # w1: resident
            pl.BlockSpec((1, hidden), lambda i: (0, 0)),          # b1: resident
            pl.BlockSpec((hidden, hidden), lambda i: (0, 0)),     # w2: resident
            pl.BlockSpec((1, hidden), lambda i: (0, 0)),          # b2: resident
            pl.BlockSpec((hidden, out_dim), lambda i: (0, 0)),    # w3: resident (narrow N)
            pl.BlockSpec((1, out_dim), lambda i: (0, 0)),         # b3: resident (narrow N)
        ],
        out_specs=pl.BlockSpec((bm, out_dim), lambda i: (i, 0)),
        compiler_params=pltpu.CompilerParams(
            dimension_semantics=("parallel",),
            vmem_limit_bytes=vmem_limit,
        ),
        cost_estimate=pl.CostEstimate(
            flops=flops, transcendentals=0, bytes_accessed=bytes_accessed
        ),
    )(x_in, w1, b1, w2, b2, w3, b3)

    if batch_p != batch:
        return out_full[:batch]
    return out_full


def reference_forward(x, w1, b1, w2, b2, w3, b3):
    h1 = jnp.maximum(x @ w1 + b1, 0.0)
    h2 = jnp.maximum(h1 @ w2 + b2, 0.0)
    return h2 @ w3 + b3


def init_params(key, input_dim, hidden_dim, out_dim):
    # Deterministic init mimicking PyTorch Linear's uniform(-1/sqrt(fan_in), 1/sqrt(fan_in)).
    ks = jax.random.split(key, 6)

    def lin(kw, kb, fan_in, fan_out):
        bound = 1.0 / jnp.sqrt(fan_in)
        w = jax.random.uniform(kw, (fan_in, fan_out), jnp.float32, -bound, bound)
        b = jax.random.uniform(kb, (1, fan_out), jnp.float32, -bound, bound)
        return w, b

    w1, b1 = lin(ks[0], ks[1], input_dim, hidden_dim)
    w2, b2 = lin(ks[2], ks[3], hidden_dim, hidden_dim)
    w3, b3 = lin(ks[4], ks[5], hidden_dim, out_dim)
    return w1, b1, w2, b2, w3, b3


if __name__ == "__main__":
    key = jax.random.PRNGKey(0)
    kx, kp = jax.random.split(key)

    input_dim, hidden_dim, out_dim = 32, 256, 3
    raw_params = init_params(kp, input_dim, hidden_dim, out_dim)
    ref_args = raw_params

    # Prepared-once parameters (hoisted casts): exact f32 path + default bf16 path.
    params_f32 = prepare_params(*raw_params, use_bf16=False)
    params_bf16 = prepare_params(*raw_params, use_bf16=True)

    # Small batch (single grid step), exact f32 semantics vs reference.
    x_small = jax.random.normal(kx, (8, input_dim), jnp.float32)
    out = mlp_forward(x_small, params_f32)
    jax.block_until_ready(out)
    ref = reference_forward(x_small, *ref_args)
    assert out.shape == (8, out_dim)
    assert jnp.allclose(out, ref, atol=1e-5, rtol=1e-5), "f32 small-batch mismatch vs reference"

    # Larger, non-tile-aligned batch exercising the multi-step grid + ragged-tail padding.
    x_big = jax.random.normal(kx, (1000, input_dim), jnp.float32)
    out_big = mlp_forward(x_big, params_f32)
    jax.block_until_ready(out_big)
    ref_big = reference_forward(x_big, *ref_args)
    assert out_big.shape == (1000, out_dim)
    assert jnp.allclose(out_big, ref_big, atol=1e-4, rtol=1e-4), "f32 tiled-batch mismatch"

    # Default bf16 matmul-operand path (all generations); f32 accumulation + f32 epilogue.
    out_bf16 = mlp_forward(x_big, params_bf16)
    jax.block_until_ready(out_bf16)
    assert out_bf16.shape == (1000, out_dim)
    assert float(jnp.max(jnp.abs(out_bf16 - ref_big))) < 7.5e-2, "bf16 path diverged too far"

    print("KERNEL_OK")
</pallas_src>

<mosaic_0001>
module attributes {stable_mosaic.version = 11 : i64} {
  func.func @mlp_kernel(%arg0: i32, %arg1: memref<8x32xf32, #tpu.memory_space<vmem>>, %arg2: memref<32x256xf32, #tpu.memory_space<vmem>>, %arg3: memref<1x256xf32, #tpu.memory_space<vmem>>, %arg4: memref<256x256xf32, #tpu.memory_space<vmem>>, %arg5: memref<1x256xf32, #tpu.memory_space<vmem>>, %arg6: memref<256x3xf32, #tpu.memory_space<vmem>>, %arg7: memref<1x3xf32, #tpu.memory_space<vmem>>, %arg8: memref<8x3xf32, #tpu.memory_space<vmem>>) attributes {dimension_semantics = [#tpu.dimension_semantics<parallel>], iteration_bounds = array<i64: 1>, scalar_prefetch = 0 : i64, scratch_operands = 0 : i64, tpu.core_type = #tpu.core_type<tc>, window_params = [{transform_indices = @transform_0, window_bounds = array<i64: 8, 32>}, {pipeline_mode = #tpu.pipeline_mode<synchronous>, transform_indices = @transform_1, window_bounds = array<i64: 32, 256>}, {pipeline_mode = #tpu.pipeline_mode<synchronous>, transform_indices = @transform_2, window_bounds = array<i64: 1, 256>}, {pipeline_mode = #tpu.pipeline_mode<synchronous>, transform_indices = @transform_3, window_bounds = array<i64: 256, 256>}, {pipeline_mode = #tpu.pipeline_mode<synchronous>, transform_indices = @transform_4, window_bounds = array<i64: 1, 256>}, {pipeline_mode = #tpu.pipeline_mode<synchronous>, transform_indices = @transform_5, window_bounds = array<i64: 256, 3>}, {pipeline_mode = #tpu.pipeline_mode<synchronous>, transform_indices = @transform_6, window_bounds = array<i64: 1, 3>}, {transform_indices = @transform_7, window_bounds = array<i64: 8, 3>}]} {
    %c0 = arith.constant 0 : index
    %c0_0 = arith.constant 0 : index
    %0 = vector.load %arg1[%c0, %c0_0] : memref<8x32xf32, #tpu.memory_space<vmem>>, vector<8x32xf32>
    %c0_1 = arith.constant 0 : index
    %c0_2 = arith.constant 0 : index
    %1 = vector.load %arg2[%c0_1, %c0_2] : memref<32x256xf32, #tpu.memory_space<vmem>>, vector<32x256xf32>
    %cst = arith.constant dense<0.000000e+00> : vector<8x256xf32>
    %2 = tpu.matmul %0, %1, %cst {dimension_numbers = #tpu.dot_dimension_numbers<[1], [0], [0], [1], [0, 0, 1, 1], [], []>} : vector<8x32xf32>, vector<32x256xf32>, vector<8x256xf32> -> vector<8x256xf32>
    %c0_3 = arith.constant 0 : index
    %c0_4 = arith.constant 0 : index
    %3 = vector.load %arg3[%c0_3, %c0_4] : memref<1x256xf32, #tpu.memory_space<vmem>>, vector<1x256xf32>
    %4 = vector.broadcast %3 : vector<1x256xf32> to vector<8x256xf32>
    %5 = arith.addf %2, %4 : vector<8x256xf32>
    %cst_5 = arith.constant 0.000000e+00 : f32
    %6 = vector.broadcast %cst_5 : f32 to vector<8x256xf32>
    %7 = arith.maximumf %5, %6 : vector<8x256xf32>
    %c0_6 = arith.constant 0 : index
    %c0_7 = arith.constant 0 : index
    %8 = vector.load %arg4[%c0_6, %c0_7] : memref<256x256xf32, #tpu.memory_space<vmem>>, vector<256x256xf32>
    %cst_8 = arith.constant dense<0.000000e+00> : vector<8x256xf32>
    %9 = tpu.matmul %7, %8, %cst_8 {dimension_numbers = #tpu.dot_dimension_numbers<[1], [0], [0], [1], [0, 0, 1, 1], [], []>} : vector<8x256xf32>, vector<256x256xf32>, vector<8x256xf32> -> vector<8x256xf32>
    %c0_9 = arith.constant 0 : index
    %c0_10 = arith.constant 0 : index
    %10 = vector.load %arg5[%c0_9, %c0_10] : memref<1x256xf32, #tpu.memory_space<vmem>>, vector<1x256xf32>
    %11 = vector.broadcast %10 : vector<1x256xf32> to vector<8x256xf32>
    %12 = arith.addf %9, %11 : vector<8x256xf32>
    %cst_11 = arith.constant 0.000000e+00 : f32
    %13 = vector.broadcast %cst_11 : f32 to vector<8x256xf32>
    %14 = arith.maximumf %12, %13 : vector<8x256xf32>
    %c0_12 = arith.constant 0 : index
    %c0_13 = arith.constant 0 : index
    %15 = vector.load %arg6[%c0_12, %c0_13] : memref<256x3xf32, #tpu.memory_space<vmem>>, vector<256x3xf32>
    %cst_14 = arith.constant dense<0.000000e+00> : vector<8x3xf32>
    %16 = tpu.matmul %14, %15, %cst_14 {dimension_numbers = #tpu.dot_dimension_numbers<[1], [0], [0], [1], [0, 0, 1, 1], [], []>} : vector<8x256xf32>, vector<256x3xf32>, vector<8x3xf32> -> vector<8x3xf32>
    %c0_15 = arith.constant 0 : index
    %c0_16 = arith.constant 0 : index
    %17 = vector.load %arg7[%c0_15, %c0_16] : memref<1x3xf32, #tpu.memory_space<vmem>>, vector<1x3xf32>
    %18 = vector.broadcast %17 : vector<1x3xf32> to vector<8x3xf32>
    %19 = arith.addf %16, %18 : vector<8x3xf32>
    %c0_17 = arith.constant 0 : index
    %c0_18 = arith.constant 0 : index
    %20 = vector.load %arg8[%c0_17, %c0_18] : memref<8x3xf32, #tpu.memory_space<vmem>>, vector<8x3xf32>
    tpu.vector_store %arg8[%c0_17, %c0_18], %19 {strides = array<i32>} : memref<8x3xf32, #tpu.memory_space<vmem>>, vector<8x3xf32>,
    return
  }
  func.func @transform_0(%arg0: i32) -> (i32, i32) {
    %c0_i32 = arith.constant 0 : i32
    %c0_i32_0 = arith.constant 0 : i32
    return %arg0, %c0_i32 : i32, i32
  }
  func.func @transform_1(%arg0: i32) -> (i32, i32) {
    %c0_i32 = arith.constant 0 : i32
    %c0_i32_0 = arith.constant 0 : i32
    %c0_i32_1 = arith.constant 0 : i32
    return %c0_i32, %c0_i32_0 : i32, i32
  }
  func.func @transform_2(%arg0: i32) -> (i32, i32) {
    %c0_i32 = arith.constant 0 : i32
    %c0_i32_0 = arith.constant 0 : i32
    %c0_i32_1 = arith.constant 0 : i32
    return %c0_i32, %c0_i32_0 : i32, i32
  }
  func.func @transform_3(%arg0: i32) -> (i32, i32) {
    %c0_i32 = arith.constant 0 : i32
    %c0_i32_0 = arith.constant 0 : i32
    %c0_i32_1 = arith.constant 0 : i32
    return %c0_i32, %c0_i32_0 : i32, i32
  }
  func.func @transform_4(%arg0: i32) -> (i32, i32) {
    %c0_i32 = arith.constant 0 : i32
    %c0_i32_0 = arith.constant 0 : i32
    %c0_i32_1 = arith.constant 0 : i32
    return %c0_i32, %c0_i32_0 : i32, i32
  }
  func.func @transform_5(%arg0: i32) -> (i32, i32) {
    %c0_i32 = arith.constant 0 : i32
    %c0_i32_0 = arith.constant 0 : i32
    %c0_i32_1 = arith.constant 0 : i32
    return %c0_i32, %c0_i32_0 : i32, i32
  }
  func.func @transform_6(%arg0: i32) -> (i32, i32) {
    %c0_i32 = arith.constant 0 : i32
    %c0_i32_0 = arith.constant 0 : i32
    %c0_i32_1 = arith.constant 0 : i32
    return %c0_i32, %c0_i32_0 : i32, i32
  }
  func.func @transform_7(%arg0: i32) -> (i32, i32) {
    %c0_i32 = arith.constant 0 : i32
    %c0_i32_0 = arith.constant 0 : i32
    return %arg0, %c0_i32 : i32, i32
  }
}

</mosaic_0001>

<llo_original>
// kernel: tpu_custom_call.1
$region0: #{tpu_custom_call.1}
  #allocation0 [shape = 'u32[]', space=smem, size = 0x4, offset = 0x4, fixed_abs, tag = 'smem constant byte address 0x4 - core index']
  #allocation1 [shape = 'u32[144,128]{1,0:T(1,128)}', space=vmem, size = 0x12000, scoped, tag = 'internal scratch']
  %s0 = inlined_call_operand.vmem [shape: f32[8,32], index: 0, kind: input, shape index: {}]
  %s1 = inlined_call_operand.vmem [shape: f32[32,256], index: 1, kind: input, shape index: {}]
  %s2 = inlined_call_operand.vmem [shape: f32[1,256], index: 2, kind: input, shape index: {}]
  %s3 = inlined_call_operand.hbm [shape: f32[256,256], index: 3, kind: input, shape index: {}]
  %s4 = inlined_call_operand.vmem [shape: f32[1,256], index: 4, kind: input, shape index: {}]
  %s5 = inlined_call_operand.vmem [shape: f32[256,3], index: 5, kind: input, shape index: {}]
  %s6 = inlined_call_operand.vmem [shape: f32[1,3], index: 6, kind: input, shape index: {}]
  %s7 = inlined_call_operand.vmem [shape: f32[8,3], index: 7, kind: output, shape index: {}]
  %s8 = sld [smem:[#allocation0]]
  $region42: #{tpu_custom_call.1} parent=0
    _
  %s10 = ssub.s32 1, %s8
  %s11 = scalar_select 0, %s10, %s8
  $region1: #{tpu_custom_call.1} parent=0
    #allocation2 [shape = 'u8[262144]{0}', space=vmem, size = 0x40000, scoped, tag = 'input window, operand 3, single buffered']
    #allocation3 [shape = 's32[1]{0}', space=sflag, size = 0x4, scoped, tag = 'scoped memory for tpu_custom_call.1']
    %12 = vsyncpa [#allocation3], 0
    // Predicated region
    $region2: #{tpu_custom_call.1} parent=1 // pred_check
      _
    $region3: #{tpu_custom_call.1} parent=1 // pred_check_branch
      %14 = sbr.rel (0) target = $region5
    $region4: #{tpu_custom_call.1} parent=1 // pred_region
      _
    $region5: #{tpu_custom_call.1} parent=1 // pred_fallthru
      _
    // Predicated region
    $region6: #{tpu_custom_call.1} parent=1 // pred_check
      _
    $region7: #{tpu_custom_call.1} parent=1 // pred_check_branch
      %16 = sbr.rel (0) target = $region9
    $region8: #{tpu_custom_call.1} parent=1 // pred_region
      _
    $region9: #{tpu_custom_call.1} parent=1 // pred_fallthru
      _
    // Predicated region
    $region10: #{tpu_custom_call.1} parent=1 // pred_check
      _
    $region11: #{tpu_custom_call.1} parent=1 // pred_check_branch
      %18 = sbr.rel (0) target = $region13
    $region12: #{tpu_custom_call.1} parent=1 // pred_region
      _
    $region13: #{tpu_custom_call.1} parent=1 // pred_fallthru
      _
    // Predicated region
    $region14: #{tpu_custom_call.1} parent=1 // pred_check
      _
    $region15: #{tpu_custom_call.1} parent=1 // pred_check_branch
      %20 = sbr.rel (0) target = $region17
    $region16: #{tpu_custom_call.1} parent=1 // pred_region
      %s22 = ssub.s32 8192, 8192
      %23 = vsyncadd [#allocation3], %s22
      %s24 = sshll.u32 [#allocation2], 4
      %s25 = int_to_ptr.vmem [resolvable:$true] %s24
      %30 = dma.hbm_to_vmem [thread:$0]  %s3, 8192, %s25, [#allocation3], 256, 256, 16
    $region17: #{tpu_custom_call.1} parent=1 // pred_fallthru
      _
    // Predicated region
    $region18: #{tpu_custom_call.1} parent=1 // pred_check
      _
    $region19: #{tpu_custom_call.1} parent=1 // pred_check_branch
      %32 = sbr.rel (0) target = $region21
    $region20: #{tpu_custom_call.1} parent=1 // pred_region
      _
    $region21: #{tpu_custom_call.1} parent=1 // pred_fallthru
      _
    // Predicated region
    $region22: #{tpu_custom_call.1} parent=1 // pred_check
      _
    $region23: #{tpu_custom_call.1} parent=1 // pred_check_branch
      %34 = sbr.rel (0) target = $region25
    $region24: #{tpu_custom_call.1} parent=1 // pred_region
      _
    $region25: #{tpu_custom_call.1} parent=1 // pred_fallthru
      _
    // Predicated region
    $region26: #{tpu_custom_call.1} parent=1 // pred_check
      _
    $region27: #{tpu_custom_call.1} parent=1 // pred_check_branch
      %36 = sbr.rel (0) target = $region29
    $region28: #{tpu_custom_call.1} parent=1 // pred_region
      _
    $region29: #{tpu_custom_call.1} parent=1 // pred_fallthru
      _
    // Predicated region
    $region30: #{tpu_custom_call.1} parent=1 // pred_check
      _
    $region31: #{tpu_custom_call.1} parent=1 // pred_check_branch
      %38 = sbr.rel (0) target = $region33
    $region32: #{tpu_custom_call.1} parent=1 // pred_region
      %39 = dma.done [#allocation3], 8192
    $region33: #{tpu_custom_call.1} parent=1 // pred_fallthru
      _
    %v40 = vld [vmem:[%s0] sm:$0xff]
    %v41 = vld [vmem:[%s1] sm:$0xff]
    %v42 = vld [vmem:[%s1 + $0x8] sm:$0xff]
    %v43 = vld [vmem:[%s1 + $0x10] sm:$0xff]
    %v44 = vld [vmem:[%s1 + $0x18] sm:$0xff]
    %v45 = vld [vmem:[%s1 + $0x20] sm:$0xff]
    %v46 = vld [vmem:[%s1 + $0x28] sm:$0xff]
    %v47 = vld [vmem:[%s1 + $0x30] sm:$0xff]
    %v48 = vld [vmem:[%s1 + $0x38] sm:$0xff]
    %v49 = vld [vmem:[%s2] sm:$0x3]
    %v51 = vlaneseq
    %v52 = vshrl.u32 %v51, 7
    %v53 = vsub.s32 0, %v52
    %v54 = vrot.slane %v49, %v53
    %v55 = vlaneseq
    %v56 = vshrl.u32 %v55, 7
    %v57 = vsub.s32 1, %v56
    %v58 = vrot.slane %v49, %v57
    %vm61 = vcmask 261120
    %v63 = vsel %vm61, %v40, 0
    %65 = vmatprep.subr.mxu0 0.0
    %66 = vmatpush1.msra.mxu0 0.0
    %67 = vmatprep.subr.mxu0 0.0
    %68 = vmatpush1.msra.mxu0 0.0
    %69 = vmatprep.subr.mxu0 0.0
    %70 = vmatpush1.msra.mxu0 0.0
    %71 = vmatprep.subr.mxu0 0.0
    %72 = vmatpush1.msra.mxu0 0.0
    %73 = vmatprep.subr.mxu0 0.0
    %74 = vmatpush1.msra.mxu0 0.0
    %75 = vmatprep.subr.mxu0 0.0
    %76 = vmatpush1.msra.mxu0 0.0
    %77 = vmatprep.subr.mxu0 0.0
    %78 = vmatpush1.msra.mxu0 0.0
    %79 = vmatprep.subr.mxu0 0.0
    %80 = vmatpush1.msra.mxu0 0.0
    %81 = vmatprep.subr.mxu0 0.0
    %82 = vmatpush1.msra.mxu0 0.0
    %83 = vmatprep.subr.mxu0 0.0
    %84 = vmatpush1.msra.mxu0 0.0
    %85 = vmatprep.subr.mxu0 0.0
    %86 = vmatpush1.msra.mxu0 0.0
    %87 = vmatprep.subr.mxu0 0.0
    %88 = vmatpush1.msra.mxu0 0.0
    %89 = vmatprep.subr.mxu0 %v48
    %90 = vmatpush1.msra.mxu0 %v47
    %91 = vmatprep.subr.mxu0 %v46
    %92 = vmatpush1.msra.mxu0 %v45
    %93 = vmatprep.subr.mxu0 %v44
    %94 = vmatpush1.msra.mxu0 %v43
    %95 = vmatprep.subr.mxu0 %v42
    %96 = vmatpush1.msra.mxu0 %v41
    %97 = vmatprep.subr.mxu0 0.0
    %98 = vmatpush2.msra.mxu0 0.0
    %99 = vmatprep.subr.mxu0 0.0
    %100 = vmatpush2.msra.mxu0 0.0
    %101 = vmatprep.subr.mxu0 0.0
    %102 = vmatpush2.msra.mxu0 0.0
    %103 = vmatprep.subr.mxu0 0.0
    %104 = vmatpush2.msra.mxu0 0.0
    %105 = vmatprep.subr.mxu0 0.0
    %106 = vmatpush2.msra.mxu0 0.0
    %107 = vmatprep.subr.mxu0 0.0
    %108 = vmatpush2.msra.mxu0 0.0
    %109 = vmatprep.subr.mxu0 0.0
    %110 = vmatpush2.msra.mxu0 0.0
    %111 = vmatprep.subr.mxu0 0.0
    %112 = vmatpush2.msra.mxu0 0.0
    %113 = vmatprep.subr.mxu0 0.0
    %114 = vmatpush2.msra.mxu0 0.0
    %115 = vmatprep.subr.mxu0 0.0
    %116 = vmatpush2.msra.mxu0 0.0
    %117 = vmatprep.subr.mxu0 0.0
    %118 = vmatpush2.msra.mxu0 0.0
    %119 = vmatprep.subr.mxu0 0.0
    %120 = vmatpush2.msra.mxu0 0.0
    %121 = vmatprep.subr.mxu0 0.0
    %122 = vmatpush2.msra.mxu0 0.0
    %123 = vmatprep.subr.mxu0 0.0
    %124 = vmatpush2.msra.mxu0 0.0
    %125 = vmatprep.subr.mxu0 0.0
    %126 = vmatpush2.msra.mxu0 0.0
    %127 = vmatprep.subr.mxu0 0.0
    %128 = vmatpush2.msra.mxu0 0.0
    %129 = vmatprep.mubr.f32.mxu0 0.0
    %130 = vmatmul.mubr.f32.gmra.mxu0 %v63
    %v131 = vpop.f32.mrf.mxu0
    %v132 = vadd.f32 %v54, %v131
    %v133 = vpop.f32.mrf.mxu0
    %v134 = vadd.f32 %v58, %v133
    %135 = vdwg.mxu0
    %v136 = vmax.f32 %v132, 0.0
    %v137 = vmax.f32 %v134, 0.0
    %v138 = vld [vmem:[#allocation2] sm:$0xff]
    %v139 = vld [vmem:[#allocation2 + $0x8] sm:$0xff]
    %v140 = vld [vmem:[#allocation2 + $0x10] sm:$0xff]
    %v141 = vld [vmem:[#allocation2 + $0x18] sm:$0xff]
    %v142 = vld [vmem:[#allocation2 + $0x20] sm:$0xff]
    %v143 = vld [vmem:[#allocation2 + $0x28] sm:$0xff]
    %v144 = vld [vmem:[#allocation2 + $0x30] sm:$0xff]
    %v145 = vld [vmem:[#allocation2 + $0x38] sm:$0xff]
    %v146 = vld [vmem:[#allocation2 + $0x40] sm:$0xff]
    %v147 = vld [vmem:[#allocation2 + $0x48] sm:$0xff]
    %v148 = vld [vmem:[#allocation2 + $0x50] sm:$0xff]
    %v149 = vld [vmem:[#allocation2 + $0x58] sm:$0xff]
    %v150 = vld [vmem:[#allocation2 + $0x60] sm:$0xff]
    %v151 = vld [vmem:[#allocation2 + $0x68] sm:$0xff]
    %v152 = vld [vmem:[#allocation2 + $0x70] sm:$0xff]
    %v153 = vld [vmem:[#allocation2 + $0x78] sm:$0xff]
    %v154 = vld [vmem:[#allocation2 + $0x80] sm:$0xff]
    %v155 = vld [vmem:[#allocation2 + $0x88] sm:$0xff]
    %v156 = vld [vmem:[#allocation2 + $0x90] sm:$0xff]
    %v157 = vld [vmem:[#allocation2 + $0x98] sm:$0xff]
    %v158 = vld [vmem:[#allocation2 + $0xa0] sm:$0xff]
    %v159 = vld [vmem:[#allocation2 + $0xa8] sm:$0xff]
    %v160 = vld [vmem:[#allocation2 + $0xb0] sm:$0xff]
    %v161 = vld [vmem:[#allocation2 + $0xb8] sm:$0xff]
    %v162 = vld [vmem:[#allocation2 + $0xc0] sm:$0xff]
    %v163 = vld [vmem:[#allocation2 + $0xc8] sm:$0xff]
    %v164 = vld [vmem:[#allocation2 + $0xd0] sm:$0xff]
    %v165 = vld [vmem:[#allocation2 + $0xd8] sm:$0xff]
    %v166 = vld [vmem:[#allocation2 + $0xe0] sm:$0xff]
    %v167 = vld [vmem:[#allocation2 + $0xe8] sm:$0xff]
    %v168 = vld [vmem:[#allocation2 + $0xf0] sm:$0xff]
    %v169 = vld [vmem:[#allocation2 + $0xf8] sm:$0xff]
    %v170 = vld [vmem:[#allocation2 + $0x100] sm:$0xff]
    %v171 = vld [vmem:[#allocation2 + $0x108] sm:$0xff]
    %v172 = vld [vmem:[#allocation2 + $0x110] sm:$0xff]
    %v173 = vld [vmem:[#allocation2 + $0x118] sm:$0xff]
    %v174 = vld [vmem:[#allocation2 + $0x120] sm:$0xff]
    %v175 = vld [vmem:[#allocation2 + $0x128] sm:$0xff]
    %v176 = vld [vmem:[#allocation2 + $0x130] sm:$0xff]
    %v177 = vld [vmem:[#allocation2 + $0x138] sm:$0xff]
    %v178 = vld [vmem:[#allocation2 + $0x140] sm:$0xff]
    %v179 = vld [vmem:[#allocation2 + $0x148] sm:$0xff]
    %v180 = vld [vmem:[#allocation2 + $0x150] sm:$0xff]
    %v181 = vld [vmem:[#allocation2 + $0x158] sm:$0xff]
    %v182 = vld [vmem:[#allocation2 + $0x160] sm:$0xff]
    %v183 = vld [vmem:[#allocation2 + $0x168] sm:$0xff]
    %v184 = vld [vmem:[#allocation2 + $0x170] sm:$0xff]
    %v185 = vld [vmem:[#allocation2 + $0x178] sm:$0xff]
    %v186 = vld [vmem:[#allocation2 + $0x180] sm:$0xff]
    %v187 = vld [vmem:[#allocation2 + $0x188] sm:$0xff]
    %v188 = vld [vmem:[#allocation2 + $0x190] sm:$0xff]
    %v189 = vld [vmem:[#allocation2 + $0x198] sm:$0xff]
    %v190 = vld [vmem:[#allocation2 + $0x1a0] sm:$0xff]
    %v191 = vld [vmem:[#allocation2 + $0x1a8] sm:$0xff]
    %v192 = vld [vmem:[#allocation2 + $0x1b0] sm:$0xff]
    %v193 = vld [vmem:[#allocation2 + $0x1b8] sm:$0xff]
    %v194 = vld [vmem:[#allocation2 + $0x1c0] sm:$0xff]
    %v195 = vld [vmem:[#allocation2 + $0x1c8] sm:$0xff]
    %v196 = vld [vmem:[#allocation2 + $0x1d0] sm:$0xff]
    %v197 = vld [vmem:[#allocation2 + $0x1d8] sm:$0xff]
    %v198 = vld [vmem:[#allocation2 + $0x1e0] sm:$0xff]
    %v199 = vld [vmem:[#allocation2 + $0x1e8] sm:$0xff]
    %v200 = vld [vmem:[#allocation2 + $0x1f0] sm:$0xff]
    %v201 = vld [vmem:[#allocation2 + $0x1f8] sm:$0xff]
    %v202 = vld [vmem:[%s4] sm:$0x3]
    %v204 = vlaneseq
    %v205 = vshrl.u32 %v204, 7
    %v206 = vsub.s32 0, %v205
    %v207 = vrot.slane %v202, %v206
    %v208 = vlaneseq
    %v209 = vshrl.u32 %v208, 7
    %v210 = vsub.s32 1, %v209
    %v211 = vrot.slane %v202, %v210
    %214 = vmatprep.subr.mxu0 %v169
    %215 = vmatpush1.msra.mxu0 %v168
    %216 = vmatprep.subr.mxu0 %v167
    %217 = vmatpush1.msra.mxu0 %v166
    %218 = vmatprep.subr.mxu0 %v165
    %219 = vmatpush1.msra.mxu0 %v164
    %220 = vmatprep.subr.mxu0 %v163
    %221 = vmatpush1.msra.mxu0 %v162
    %222 = vmatprep.subr.mxu0 %v161
    %223 = vmatpush1.msra.mxu0 %v160
    %224 = vmatprep.subr.mxu0 %v159
    %225 = vmatpush1.msra.mxu0 %v158
    %226 = vmatprep.subr.mxu0 %v157
    %227 = vmatpush1.msra.mxu0 %v156
    %228 = vmatprep.subr.mxu0 %v155
    %229 = vmatpush1.msra.mxu0 %v154
    %230 = vmatprep.subr.mxu0 %v153
    %231 = vmatpush1.msra.mxu0 %v152
    %232 = vmatprep.subr.mxu0 %v151
    %233 = vmatpush1.msra.mxu0 %v150
    %234 = vmatprep.subr.mxu0 %v149
    %235 = vmatpush1.msra.mxu0 %v148
    %236 = vmatprep.subr.mxu0 %v147
    %237 = vmatpush1.msra.mxu0 %v146
    %238 = vmatprep.subr.mxu0 %v145
    %239 = vmatpush1.msra.mxu0 %v144
    %240 = vmatprep.subr.mxu0 %v143
    %241 = vmatpush1.msra.mxu0 %v142
    %242 = vmatprep.subr.mxu0 %v141
    %243 = vmatpush1.msra.mxu0 %v140
    %244 = vmatprep.subr.mxu0 %v139
    %245 = vmatpush1.msra.mxu0 %v138
    %246 = vmatprep.subr.mxu0 %v201
    %247 = vmatpush2.msra.mxu0 %v200
    %248 = vmatprep.subr.mxu0 %v199
    %249 = vmatpush2.msra.mxu0 %v198
    %250 = vmatprep.subr.mxu0 %v197
    %251 = vmatpush2.msra.mxu0 %v196
    %252 = vmatprep.subr.mxu0 %v195
    %253 = vmatpush2.msra.mxu0 %v194
    %254 = vmatprep.subr.mxu0 %v193
    %255 = vmatpush2.msra.mxu0 %v192
    %256 = vmatprep.subr.mxu0 %v191
    %257 = vmatpush2.msra.mxu0 %v190
    %258 = vmatprep.subr.mxu0 %v189
    %259 = vmatpush2.msra.mxu0 %v188
    %260 = vmatprep.subr.mxu0 %v187
    %261 = vmatpush2.msra.mxu0 %v186
    %262 = vmatprep.subr.mxu0 %v185
    %263 = vmatpush2.msra.mxu0 %v184
    %264 = vmatprep.subr.mxu0 %v183
    %265 = vmatpush2.msra.mxu0 %v182
    %266 = vmatprep.subr.mxu0 %v181
    %267 = vmatpush2.msra.mxu0 %v180
    %268 = vmatprep.subr.mxu0 %v179
    %269 = vmatpush2.msra.mxu0 %v178
    %270 = vmatprep.subr.mxu0 %v177
    %271 = vmatpush2.msra.mxu0 %v176
    %272 = vmatprep.subr.mxu0 %v175
    %273 = vmatpush2.msra.mxu0 %v174
    %274 = vmatprep.subr.mxu0 %v173
    %275 = vmatpush2.msra.mxu0 %v172
    %276 = vmatprep.subr.mxu0 %v171
    %277 = vmatpush2.msra.mxu0 %v170
    %278 = vmatprep.mubr.f32.mxu0 %v137
    %279 = vmatmul.mubr.f32.gmra.mxu0 %v136
    %v280 = vpop.f32.mrf.mxu0
    %v281 = vadd.f32 %v207, %v280
    %v282 = vpop.f32.mrf.mxu0
    %v283 = vadd.f32 %v211, %v282
    %284 = vdwg.mxu0
    %v285 = vmax.f32 %v281, 0.0
    %v286 = vmax.f32 %v283, 0.0
    %v287 = vld [vmem:[%s5] sm:$0xff]
    %v288 = vld [vmem:[%s5 + $0x8] sm:$0xff]
    %v289 = vld [vmem:[%s5 + $0x10] sm:$0xff]
    %v290 = vld [vmem:[%s5 + $0x18] sm:$0xff]
    %v291 = vld [vmem:[%s5 + $0x20] sm:$0xff]
    %v292 = vld [vmem:[%s5 + $0x28] sm:$0xff]
    %v293 = vld [vmem:[%s5 + $0x30] sm:$0xff]
    %v294 = vld [vmem:[%s5 + $0x38] sm:$0xff]
    %v295 = vld [vmem:[%s5 + $0x40] sm:$0xff]
    %v296 = vld [vmem:[%s5 + $0x48] sm:$0xff]
    %v297 = vld [vmem:[%s5 + $0x50] sm:$0xff]
    %v298 = vld [vmem:[%s5 + $0x58] sm:$0xff]
    %v299 = vld [vmem:[%s5 + $0x60] sm:$0xff]
    %v300 = vld [vmem:[%s5 + $0x68] sm:$0xff]
    %v301 = vld [vmem:[%s5 + $0x70] sm:$0xff]
    %v302 = vld [vmem:[%s5 + $0x78] sm:$0xff]
    %v303 = vld [vmem:[%s5 + $0x80] sm:$0xff]
    %v304 = vld [vmem:[%s5 + $0x88] sm:$0xff]
    %v305 = vld [vmem:[%s5 + $0x90] sm:$0xff]
    %v306 = vld [vmem:[%s5 + $0x98] sm:$0xff]
    %v307 = vld [vmem:[%s5 + $0xa0] sm:$0xff]
    %v308 = vld [vmem:[%s5 + $0xa8] sm:$0xff]
    %v309 = vld [vmem:[%s5 + $0xb0] sm:$0xff]
    %v310 = vld [vmem:[%s5 + $0xb8] sm:$0xff]
    %v311 = vld [vmem:[%s5 + $0xc0] sm:$0xff]
    %v312 = vld [vmem:[%s5 + $0xc8] sm:$0xff]
    %v313 = vld [vmem:[%s5 + $0xd0] sm:$0xff]
    %v314 = vld [vmem:[%s5 + $0xd8] sm:$0xff]
    %v315 = vld [vmem:[%s5 + $0xe0] sm:$0xff]
    %v316 = vld [vmem:[%s5 + $0xe8] sm:$0xff]
    %v317 = vld [vmem:[%s5 + $0xf0] sm:$0xff]
    %v318 = vld [vmem:[%s5 + $0xf8] sm:$0xff]
    %v319 = vld [vmem:[%s6] sm:$0x1]
    %v321 = vlaneseq
    %v322 = vshrl.u32 %v321, 7
    %v323 = vsub.s32 0, %v322
    %v324 = vrot.slane %v319, %v323
    %326 = vmatprep.subr.mxu0 0.0
    %327 = vmatpush1.msra.mxu0 %v302
    %328 = vmatprep.subr.mxu0 0.0
    %329 = vmatpush1.msra.mxu0 %v301
    %330 = vmatprep.subr.mxu0 0.0
    %331 = vmatpush1.msra.mxu0 %v300
    %332 = vmatprep.subr.mxu0 0.0
    %333 = vmatpush1.msra.mxu0 %v299
    %334 = vmatprep.subr.mxu0 0.0
    %335 = vmatpush1.msra.mxu0 %v298
    %336 = vmatprep.subr.mxu0 0.0
    %337 = vmatpush1.msra.mxu0 %v297
    %338 = vmatprep.subr.mxu0 0.0
    %339 = vmatpush1.msra.mxu0 %v296
    %340 = vmatprep.subr.mxu0 0.0
    %341 = vmatpush1.msra.mxu0 %v295
    %342 = vmatprep.subr.mxu0 0.0
    %343 = vmatpush1.msra.mxu0 %v294
    %344 = vmatprep.subr.mxu0 0.0
    %345 = vmatpush1.msra.mxu0 %v293
    %346 = vmatprep.subr.mxu0 0.0
    %347 = vmatpush1.msra.mxu0 %v292
    %348 = vmatprep.subr.mxu0 0.0
    %349 = vmatpush1.msra.mxu0 %v291
    %350 = vmatprep.subr.mxu0 0.0
    %351 = vmatpush1.msra.mxu0 %v290
    %352 = vmatprep.subr.mxu0 0.0
    %353 = vmatpush1.msra.mxu0 %v289
    %354 = vmatprep.subr.mxu0 0.0
    %355 = vmatpush1.msra.mxu0 %v288
    %356 = vmatprep.subr.mxu0 0.0
    %357 = vmatpush1.msra.mxu0 %v287
    %358 = vmatprep.subr.mxu0 0.0
    %359 = vmatpush2.msra.mxu0 %v318
    %360 = vmatprep.subr.mxu0 0.0
    %361 = vmatpush2.msra.mxu0 %v317
    %362 = vmatprep.subr.mxu0 0.0
    %363 = vmatpush2.msra.mxu0 %v316
    %364 = vmatprep.subr.mxu0 0.0
    %365 = vmatpush2.msra.mxu0 %v315
    %366 = vmatprep.subr.mxu0 0.0
    %367 = vmatpush2.msra.mxu0 %v314
    %368 = vmatprep.subr.mxu0 0.0
    %369 = vmatpush2.msra.mxu0 %v313
    %370 = vmatprep.subr.mxu0 0.0
    %371 = vmatpush2.msra.mxu0 %v312
    %372 = vmatprep.subr.mxu0 0.0
    %373 = vmatpush2.msra.mxu0 %v311
    %374 = vmatprep.subr.mxu0 0.0
    %375 = vmatpush2.msra.mxu0 %v310
    %376 = vmatprep.subr.mxu0 0.0
    %377 = vmatpush2.msra.mxu0 %v309
    %378 = vmatprep.subr.mxu0 0.0
    %379 = vmatpush2.msra.mxu0 %v308
    %380 = vmatprep.subr.mxu0 0.0
    %381 = vmatpush2.msra.mxu0 %v307
    %382 = vmatprep.subr.mxu0 0.0
    %383 = vmatpush2.msra.mxu0 %v306
    %384 = vmatprep.subr.mxu0 0.0
    %385 = vmatpush2.msra.mxu0 %v305
    %386 = vmatprep.subr.mxu0 0.0
    %387 = vmatpush2.msra.mxu0 %v304
    %388 = vmatprep.subr.mxu0 0.0
    %389 = vmatpush2.msra.mxu0 %v303
    %390 = vmatprep.mubr.f32.mxu0 %v286
    %391 = vmatmul.mubr.f32.gmra.mxu0 %v285
    %v392 = vpop.f32.mrf.mxu0
    %v393 = vadd.f32 %v324, %v392
    %v394 = vpop.f32.mrf.mxu0
    %395 = vdwg.mxu0
    %vm396 = vcmask 23552
    %397 = vst.msk [vmem:[%s7] sm:$0xff] %vm396, %v393
    // Predicated region
    $region34: #{tpu_custom_call.1} parent=1 // pred_check
      _
    $region35: #{tpu_custom_call.1} parent=1 // pred_check_branch
      %399 = sbr.rel (0) target = $region37
    $region36: #{tpu_custom_call.1} parent=1 // pred_region
      _
    $region37: #{tpu_custom_call.1} parent=1 // pred_fallthru
      _
    // Predicated region
    $region38: #{tpu_custom_call.1} parent=1 // pred_check
      _
    $region39: #{tpu_custom_call.1} parent=1 // pred_check_branch
      %401 = sbr.rel (0) target = $region41
    $region40: #{tpu_custom_call.1} parent=1 // pred_region
      _
    $region41: #{tpu_custom_call.1} parent=1 // pred_fallthru
      _
    %402 = vsyncpa [#allocation3], 1

</llo_original>
